<compile_context>
chip_gen: v7x
topology: tpu7x:2x2x1
jax: 0.10.0
libtpu: 0.0.40
codegen_flags: <defaults>
</compile_context>

<pallas_src>
import math

import jax
import jax.numpy as jnp
from jax.experimental import pallas as pl
from jax.experimental.pallas import tpu as pltpu


# ----------------------------- kernel ----------------------------------------


def _make_kernel(method, inv_n, has_bias):
    """Neighbor-reduce (cached across output-column tiles) + MXU matmul."""

    def kernel(x_ref, w_ref, *rest):
        if has_bias:
            b_ref, o_ref, aggr_ref = rest
        else:
            o_ref, aggr_ref = rest
            b_ref = None

        # The x block index only depends on the i (row) grid axis, so it stays
        # resident across the j (output-column) axis; recompute the neighbor
        # reduction only once per row tile.
        @pl.when(pl.program_id(1) == 0)
        def _():
            if method == "max":
                a = jnp.max(x_ref[...], axis=1).astype(jnp.float32)
            else:  # sum / mean: accumulate in f32 (matches torch f32 reference)
                a = jnp.sum(x_ref[...].astype(jnp.float32), axis=1)
                if method == "mean":
                    a = a * inv_n  # compile-time constant scale
            aggr_ref[...] = a

        lhs = aggr_ref[...].astype(w_ref.dtype)
        acc = jnp.dot(lhs, w_ref[...], preferred_element_type=jnp.float32)
        if b_ref is not None:
            acc = acc + b_ref[...].astype(jnp.float32)
        o_ref[...] = acc.astype(o_ref.dtype)

    return kernel


# ----------------------------- tiling helpers ---------------------------------


def _round_up(x, m):
    return ((x + m - 1) // m) * m


def _vmem_budget():
    """Chip-aware (v5e/v6e: 128 MiB, v7x: 64 MiB) tile budget + scoped limit."""
    try:
        cap = int(pltpu.get_tpu_info().vmem_capacity_bytes)
    except Exception:
        cap = 64 * 1024 * 1024  # conservative (v7x-sized) fallback
    budget = int(cap * 0.7)     # tiles target ~70% of physical VMEM
    limit = int(min(cap - 8 * 1024 * 1024, budget + 16 * 1024 * 1024))
    return budget, max(limit, 32 * 1024 * 1024)


def _pick_tile_n(n_src, n_nei, d_in, td, x_is, w_is, o_is, budget):
    """Largest row tile (multiple of 8) whose double-buffered blocks fit `budget`.

    Accounts for the real VMEM footprint (last dim padded to 128 lanes, second
    minor to 8 sublanes).  The weight/bias blocks are tiny now (no N_nei
    replication), so `fixed` cannot blow the v7x budget for sane shapes.
    """
    d_in_l = _round_up(d_in, 128)
    n_nei_s = _round_up(n_nei, 8)
    td_l = _round_up(td, 128)
    # row-count independent: double-buffered weight + bias blocks
    fixed = 2 * _round_up(d_in, 8) * td_l * w_is + 2 * 8 * td_l * max(o_is, 4)
    # per output row: double-buffered x + out blocks and the f32 aggregate scratch
    per_row = 2 * n_nei_s * d_in_l * x_is + 2 * td_l * o_is + d_in_l * 4
    avail = budget - fixed
    if avail < 8 * per_row:
        tn = 8  # floor; only reachable for pathological n_nei * d_in
    else:
        tn = (int(avail // per_row) // 8) * 8
    tn = max(8, min(tn, 1024, _round_up(n_src, 8)))
    return tn


# ----------------------------- wrapper ----------------------------------------


def neighbor_aggregator(neighbor_feature, weight, *, aggr_method="mean",
                        bias=None, tile_n=None, tile_dout=None):
    """Pallas implementation of NeihborAggregator.forward."""
    n_src, n_nei, d_in = neighbor_feature.shape
    d_in_w, d_out = weight.shape
    if d_in != d_in_w:
        raise ValueError(f"weight shape {weight.shape} incompatible with input "
                         f"feature dim {d_in}")
    if aggr_method not in ("mean", "sum", "max"):
        raise ValueError(
            f"Unknown aggr type, expected sum|max|mean, but got {aggr_method}")

    out_dtype = jnp.promote_types(neighbor_feature.dtype, weight.dtype)
    x_is = jnp.dtype(neighbor_feature.dtype).itemsize
    w_is = jnp.dtype(weight.dtype).itemsize
    o_is = jnp.dtype(out_dtype).itemsize

    budget, vmem_limit = _vmem_budget()

    # ---- output-column tile: never pad D_out (avoids a trailing slice pass). ----
    if tile_dout is not None:
        td = int(tile_dout)
    elif d_out % 128 == 0:
        td = min(d_out, 512)   # lane-dense, unmasked stores, MXU-friendly N
    else:
        td = d_out             # full extent -> single block, masked stores
    n_j = pl.cdiv(d_out, td)

    # ---- row tile from the VMEM budget. ----
    if tile_n is not None:
        tn = int(tile_n)
    else:
        tn = _pick_tile_n(n_src, n_nei, d_in, td, x_is, w_is, o_is, budget)
        # v7x has 2 TensorCores: make sure the 'parallel' grid has >= 2 blocks
        # so one core is not left idle on small/medium problems.
        if n_j * pl.cdiv(n_src, tn) < 2 and n_src >= 16:
            tn = min(tn, _round_up(pl.cdiv(n_src, 2), 8))
    n_i = pl.cdiv(n_src, tn)

    # ---- specs ----
    in_specs = [
        pl.BlockSpec((tn, n_nei, d_in), lambda i, j: (i, 0, 0)),  # input stream
        pl.BlockSpec((d_in, td), lambda i, j: (0, j)),            # small, ~resident
    ]
    inputs = [neighbor_feature, weight]
    has_bias = bias is not None
    if has_bias:
        in_specs.append(pl.BlockSpec((1, td), lambda i, j: (0, j)))
        inputs.append(bias.reshape(1, d_out))

    kernel = _make_kernel(aggr_method, 1.0 / float(n_nei), has_bias)

    flops = 2 * n_src * d_in * d_out + n_src * n_nei * d_in
    bytes_acc = (n_src * n_nei * d_in * x_is          # input stream (dominant)
                 + d_in * d_out * w_is                # weight (fetched ~once)
                 + n_src * d_out * o_is               # output writeback
                 + (d_out * jnp.dtype(bias.dtype).itemsize if has_bias else 0))

    out = pl.pallas_call(
        kernel,
        out_shape=jax.ShapeDtypeStruct((n_src, d_out), out_dtype),
        grid_spec=pltpu.PrefetchScalarGridSpec(
            num_scalar_prefetch=0,
            grid=(n_i, n_j),
            in_specs=in_specs,
            out_specs=pl.BlockSpec((tn, td), lambda i, j: (i, j)),
            scratch_shapes=[pltpu.VMEM((tn, d_in), jnp.float32)],  # cached aggregate
        ),
        compiler_params=pltpu.CompilerParams(
            # j is 'arbitrary': the aggregate scratch computed at j==0 is reused
            # for all output-column tiles of the same row tile.
            dimension_semantics=("parallel", "arbitrary"),
            vmem_limit_bytes=vmem_limit),
        cost_estimate=pl.CostEstimate(flops=int(flops), transcendentals=0,
                                      bytes_accessed=int(bytes_acc)),
    )(*inputs)
    return out


# ----------------------------- reference & demo --------------------------------


def _reference(neighbor_feature, weight, aggr_method="mean", bias=None):
    if aggr_method == "mean":
        aggr = jnp.mean(neighbor_feature, axis=1)
    elif aggr_method == "sum":
        aggr = jnp.sum(neighbor_feature, axis=1)
    else:  # max: torch returns (values, indices); the intended value path
        aggr = jnp.max(neighbor_feature, axis=1)
    out = aggr @ weight
    if bias is not None:
        out = out + bias
    return out


if __name__ == "__main__":
    # Small shapes consistent with the module's forward:
    #   neighbor_feature: N_src x N_nei x input_dim ; weight: input_dim x output_dim
    N_SRC, N_NEI, D_IN, D_OUT = 64, 8, 32, 32

    key = jax.random.PRNGKey(0)
    kx, kw, kb = jax.random.split(key, 3)

    neighbor_feature = jax.random.normal(kx, (N_SRC, N_NEI, D_IN), dtype=jnp.float32)

    # Deterministic kaiming_uniform-style init for weight (input_dim, output_dim).
    fan_in = D_OUT  # torch kaiming_uniform_ uses tensor.size(1) as fan_in
    bound = math.sqrt(6.0 / fan_in)
    weight = jax.random.uniform(kw, (D_IN, D_OUT), dtype=jnp.float32,
                                minval=-bound, maxval=bound)
    bias = 0.1 * jax.random.normal(kb, (D_OUT,), dtype=jnp.float32)

    # Exercise all code paths: mean (module default, use_bias=False),
    # sum with in-kernel bias epilogue, and max.
    for aggr, b in (("mean", None), ("sum", bias), ("max", None)):
        out = neighbor_aggregator(neighbor_feature, weight, aggr_method=aggr, bias=b)
        out = jax.block_until_ready(out)
        ref = _reference(neighbor_feature, weight, aggr_method=aggr, bias=b)
        assert out.shape == (N_SRC, D_OUT), f"bad shape for {aggr}: {out.shape}"
        assert jnp.allclose(out, ref, atol=1e-4, rtol=1e-4), f"mismatch for {aggr}"

    print("KERNEL_OK")
</pallas_src>

<mosaic_0001>
module attributes {stable_mosaic.version = 11 : i64} {
  func.func @kernel(%arg0: i32, %arg1: i32, %arg2: memref<32x8x32xf32, #tpu.memory_space<vmem>>, %arg3: memref<32x32xf32, #tpu.memory_space<vmem>>, %arg4: memref<32x32xf32, #tpu.memory_space<vmem>>, %arg5: memref<32x32xf32, #tpu.memory_space<vmem>>) attributes {dimension_semantics = [#tpu.dimension_semantics<parallel>, #tpu.dimension_semantics<arbitrary>], iteration_bounds = array<i64: 2, 1>, scalar_prefetch = 0 : i64, scratch_operands = 1 : i64, tpu.core_type = #tpu.core_type<tc>, window_params = [{transform_indices = @transform_0, window_bounds = array<i64: 32, 8, 32>}, {transform_indices = @transform_1, window_bounds = array<i64: 32, 32>}, {transform_indices = @transform_2, window_bounds = array<i64: 32, 32>}]} {
    %c0_i32 = arith.constant 0 : i32
    %0 = arith.cmpi eq, %arg1, %c0_i32 : i32
    %1 = arith.extui %0 : i1 to i32
    %c0_i32_0 = arith.constant 0 : i32
    %2 = arith.cmpi ne, %1, %c0_i32_0 : i32
    scf.if %2 {
      %c0_6 = arith.constant 0 : index
      %c0_7 = arith.constant 0 : index
      %c0_8 = arith.constant 0 : index
      %7 = vector.load %arg2[%c0_6, %c0_7, %c0_8] : memref<32x8x32xf32, #tpu.memory_space<vmem>>, vector<32x8x32xf32>
      %cst_9 = arith.constant dense<0.000000e+00> : vector<32x32xf32>
      %8 = vector.multi_reduction <add>, %7, %cst_9 [1] : vector<32x8x32xf32> to vector<32x32xf32>
      %cst_10 = arith.constant 1.250000e-01 : f32
      %9 = vector.broadcast %cst_10 : f32 to vector<32x32xf32>
      %10 = arith.mulf %8, %9 : vector<32x32xf32>
      %c0_11 = arith.constant 0 : index
      %c0_12 = arith.constant 0 : index
      %11 = vector.load %arg5[%c0_11, %c0_12] : memref<32x32xf32, #tpu.memory_space<vmem>>, vector<32x32xf32>
      tpu.vector_store %arg5[%c0_11, %c0_12], %10 {strides = array<i32>} : memref<32x32xf32, #tpu.memory_space<vmem>>, vector<32x32xf32>,
    } else {
    }
    %c0 = arith.constant 0 : index
    %c0_1 = arith.constant 0 : index
    %3 = vector.load %arg5[%c0, %c0_1] : memref<32x32xf32, #tpu.memory_space<vmem>>, vector<32x32xf32>
    %c0_2 = arith.constant 0 : index
    %c0_3 = arith.constant 0 : index
    %4 = vector.load %arg3[%c0_2, %c0_3] : memref<32x32xf32, #tpu.memory_space<vmem>>, vector<32x32xf32>
    %cst = arith.constant dense<0.000000e+00> : vector<32x32xf32>
    %5 = tpu.matmul %3, %4, %cst {dimension_numbers = #tpu.dot_dimension_numbers<[1], [0], [0], [1], [0, 0, 1, 1], [], []>} : vector<32x32xf32>, vector<32x32xf32>, vector<32x32xf32> -> vector<32x32xf32>
    %c0_4 = arith.constant 0 : index
    %c0_5 = arith.constant 0 : index
    %6 = vector.load %arg4[%c0_4, %c0_5] : memref<32x32xf32, #tpu.memory_space<vmem>>, vector<32x32xf32>
    tpu.vector_store %arg4[%c0_4, %c0_5], %5 {strides = array<i32>} : memref<32x32xf32, #tpu.memory_space<vmem>>, vector<32x32xf32>,
    return
  }
  func.func @transform_0(%arg0: i32, %arg1: i32) -> (i32, i32, i32) {
    %c0_i32 = arith.constant 0 : i32
    %c0_i32_0 = arith.constant 0 : i32
    %c0_i32_1 = arith.constant 0 : i32
    return %arg0, %c0_i32, %c0_i32_0 : i32, i32, i32
  }
  func.func @transform_1(%arg0: i32, %arg1: i32) -> (i32, i32) {
    %c0_i32 = arith.constant 0 : i32
    %c0_i32_0 = arith.constant 0 : i32
    return %c0_i32, %arg1 : i32, i32
  }
  func.func @transform_2(%arg0: i32, %arg1: i32) -> (i32, i32) {
    %c0_i32 = arith.constant 0 : i32
    return %arg0, %arg1 : i32, i32
  }
}

</mosaic_0001>

<llo_original>
// kernel: tpu_custom_call.1
$region0: #{tpu_custom_call.1}
  #allocation0 [shape = 'u32[]', space=smem, size = 0x4, offset = 0x4, fixed_abs, tag = 'smem constant byte address 0x4 - core index']
  #allocation1 [shape = 'u32[144,128]{1,0:T(1,128)}', space=vmem, size = 0x12000, scoped, tag = 'internal scratch']
  #allocation2 [shape = 'f32[32,32]{1,0:T(8,128)}', space=vmem, size = 0x4000, scoped, tag = 'scratch operand']
  %s0 = inlined_call_operand.vmem [shape: f32[64,8,32], index: 0, kind: input, shape index: {}]
  %s1 = inlined_call_operand.vmem [shape: f32[32,32], index: 1, kind: input, shape index: {}]
  %s2 = inlined_call_operand.vmem [shape: f32[64,32], index: 2, kind: output, shape index: {}]
  %s3 = sld [smem:[#allocation0]]
  $region45: #{tpu_custom_call.1} parent=0
    _
  %s5 = ssub.s32 1, %s3
  %s6 = scalar_select 0, %s5, %s3
  loop: start=0, step=1, limit=4
  $region2: #{tpu_custom_call.1} parent=0 // loop_pre_header
    _
  $region3: #{tpu_custom_call.1} parent=0 // loop_header
    %s8 = sphi 0, %s12
    %p9 = scmp.ge.s32.totalorder %s8, 4
    %s15 = sphi 0, %s27
    %s16 = sphi 0, %s23
    %s17 = sphi 0, %s15
    %s18 = sphi 0, %s16
    %s19 = sphi 0, %s17
    %s20 = sphi 0, %s18
    %s30 = sphi 0, %s32
    %s33 = sphi 0, %s30
    %s34 = sphi 0, %s33
    %s50 = sphi 0, %s34
    %s56 = sphi 0, %s58
    %s59 = sphi 0, %s56
    %s60 = sphi 0, %s59
    %s76 = sphi 0, %s60
    %s84 = sphi 0, %s86
    %s87 = sphi 0, %s84
    %s88 = sphi 0, %s87
    %s104 = sphi 0, %s88
  $region4: #{tpu_custom_call.1} parent=0 // loop_header_branch
    %11 = sbr.rel (%p9) target = $region8
  $region5: #{tpu_custom_call.1} parent=0 // loop_body
    %s13 = ssub.s32 %s8, 1
    %s14 = ssub.s32 %s8, 2
    %s21 = sadd.s32 1, %s16
    %p22 = scmp.ge.s32.totalorder %s21, 1
    %s23 = scalar_select %p22, 0, %s21
    %s24 = sadd.s32 1, %s15
    %s25 = scalar_select %p22, %s24, %s15
    %p26 = scmp.ge.s32.totalorder %s25, 2
    %s27 = scalar_select %p26, 0, %s25
    %s28 = ssub.s32 %s15, %s27
    %p29 = scmp.eq.s32.totalorder %s28, 0
    %s31 = sadd.s32 %s30, 1
    %s32 = scalar_select %p29, %s30, %s31
    %p35 = pneg %p29
    %p36 = scmp.eq.s32.totalorder %s8, 1
    %p37 = por %p35, %p36
    %p38 = scmp.ne.s32.totalorder %s30, %s33
    %p39 = scmp.eq.s32.totalorder %s8, 0
    %p40 = por %p38, %p39
    %p41 = scmp.ne.s32.totalorder %s30, %s33
    %p42 = scmp.eq.s32.totalorder %s13, 1
    %p43 = por %p41, %p42
    %p44 = scmp.ne.s32.totalorder %s33, %s34
    %p45 = scmp.eq.s32.totalorder %s13, 0
    %p46 = por %p44, %p45
    %p47 = scmp.ne.s32.totalorder %s33, %s34
    %p48 = scmp.eq.s32.totalorder %s14, 1
    %p49 = por %p47, %p48
    %p51 = scmp.ne.s32.totalorder %s34, %s50
    %p52 = scmp.eq.s32.totalorder %s14, 0
    %p53 = por %p51, %p52
    %s54 = ssub.s32 %s16, %s23
    %p55 = scmp.eq.s32.totalorder %s54, 0
    %s57 = sadd.s32 %s56, 1
    %s58 = scalar_select %p55, %s56, %s57
    %p61 = pneg %p55
    %p62 = scmp.eq.s32.totalorder %s8, 1
    %p63 = por %p61, %p62
    %p64 = scmp.ne.s32.totalorder %s56, %s59
    %p65 = scmp.eq.s32.totalorder %s8, 0
    %p66 = por %p64, %p65
    %p67 = scmp.ne.s32.totalorder %s56, %s59
    %p68 = scmp.eq.s32.totalorder %s13, 1
    %p69 = por %p67, %p68
    %p70 = scmp.ne.s32.totalorder %s59, %s60
    %p71 = scmp.eq.s32.totalorder %s13, 0
    %p72 = por %p70, %p71
    %p73 = scmp.ne.s32.totalorder %s59, %s60
    %p74 = scmp.eq.s32.totalorder %s14, 1
    %p75 = por %p73, %p74
    %p77 = scmp.ne.s32.totalorder %s60, %s76
    %p78 = scmp.eq.s32.totalorder %s14, 0
    %p79 = por %p77, %p78
    %s80 = ssub.s32 %s15, %s27
    %s81 = ssub.s32 %s16, %s23
    %s82 = sor.u32 %s80, %s81
    %p83 = scmp.eq.s32.totalorder %s82, 0
    %s85 = sadd.s32 %s84, 1
    %s86 = scalar_select %p83, %s84, %s85
    %p89 = pneg %p83
    %p90 = scmp.eq.s32.totalorder %s8, 1
    %p91 = por %p89, %p90
    %p92 = scmp.ne.s32.totalorder %s84, %s87
    %p93 = scmp.eq.s32.totalorder %s8, 0
    %p94 = por %p92, %p93
    %p95 = scmp.ne.s32.totalorder %s84, %s87
    %p96 = scmp.eq.s32.totalorder %s13, 1
    %p97 = por %p95, %p96
    %p98 = scmp.ne.s32.totalorder %s87, %s88
    %p99 = scmp.eq.s32.totalorder %s13, 0
    %p100 = por %p98, %p99
    %p101 = scmp.ne.s32.totalorder %s87, %s88
    %p102 = scmp.eq.s32.totalorder %s14, 1
    %p103 = por %p101, %p102
    %p105 = scmp.ne.s32.totalorder %s88, %s104
    %p106 = scmp.eq.s32.totalorder %s14, 0
    %p107 = por %p105, %p106
    %p108 = scmp.le.s32.totalorder 1, %s8
    %p109 = scmp.lt.s32.totalorder %s8, 3
    %p110 = pnand %p108, %p109
    %p111 = pneg %p110
    // Predicated region
    $region9: #{tpu_custom_call.1} parent=5 // pred_check
      _
    $region10: #{tpu_custom_call.1} parent=5 // pred_check_branch
      %113 = sbr.rel (%p110) target = $region12
    $region11: #{tpu_custom_call.1} parent=5 // pred_region
      %s114 = ssub.s32 %s8, 1
      // Predicated region
      $region13: #{tpu_custom_call.1} parent=11 // pred_check
        %p115 = pneg %p72
      $region14: #{tpu_custom_call.1} parent=11 // pred_check_branch
        %117 = sbr.rel (%p115) target = $region16
      $region15: #{tpu_custom_call.1} parent=11 // pred_region
        %p118 = scmp.lt.s32.totalorder %s18, 0
        %s119 = scalar_select %p118, %s18, 0
        %s120 = smul.addr %s119, 8
        %s121 = scalar_lea.vmem %s1, %s120
      $region16: #{tpu_custom_call.1} parent=11 // pred_fallthru
        _
    $region12: #{tpu_custom_call.1} parent=5 // pred_fallthru
      _
    %p122 = scmp.lt.s32.totalorder %s8, 2
    // Predicated region
    $region17: #{tpu_custom_call.1} parent=5 // pred_check
      %p123 = pneg %p122
    $region18: #{tpu_custom_call.1} parent=5 // pred_check_branch
      %125 = sbr.rel (%p123) target = $region20
    $region19: #{tpu_custom_call.1} parent=5 // pred_region
      // Predicated region
      $region21: #{tpu_custom_call.1} parent=19 // pred_check
        %p126 = pneg %p40
      $region22: #{tpu_custom_call.1} parent=19 // pred_check_branch
        %128 = sbr.rel (%p126) target = $region24
      $region23: #{tpu_custom_call.1} parent=19 // pred_region
        %s129 = smul.u32 32, %s15
        %p130 = scmp.lt.s32.totalorder %s129, 63
        %s131 = scalar_select %p130, %s129, 63
        %s132 = smul.addr %s131, 8
        %s133 = scalar_lea.vmem %s0, %s132
        %s134 = smul.u32 32, %s15
      $region24: #{tpu_custom_call.1} parent=19 // pred_fallthru
        _
    $region20: #{tpu_custom_call.1} parent=5 // pred_fallthru
      _
    %p135 = scmp.le.s32.totalorder 1, %s8
    %p136 = scmp.lt.s32.totalorder %s8, 3
    %p137 = pnand %p135, %p136
    %p138 = pneg %p137
    // Predicated region
    $region25: #{tpu_custom_call.1} parent=5 // pred_check
      _
    $region26: #{tpu_custom_call.1} parent=5 // pred_check_branch
      %140 = sbr.rel (%p137) target = $region28
    $region27: #{tpu_custom_call.1} parent=5 // pred_region
      %s141 = ssub.s32 %s8, 1
      %s142 = smul.u32 32, %s17
      %p143 = scmp.lt.s32.totalorder %s142, 63
      %s144 = scalar_select %p143, %s142, 63
      %s145 = smul.addr %s144, 8
      %s146 = scalar_lea.vmem %s0, %s145
      %p147 = pneg %p46
      %p148 = pneg %p43
      %p149 = scmp.lt.s32.totalorder %s18, 0
      %s150 = scalar_select %p149, %s18, 0
      %s151 = smul.addr %s150, 8
      %s152 = scalar_lea.vmem %s1, %s151
      %p153 = pneg %p72
      %p154 = pneg %p69
      %p155 = pneg %p100
      %p156 = pneg %p97
      %s157 = smul.u32 4, %s17
      %p158 = scmp.lt.s32.totalorder %s157, 7
      %s159 = scalar_select %p158, %s157, 7
      %p160 = scmp.lt.s32.totalorder %s18, 0
      %s161 = scalar_select %p160, %s18, 0
      %s162 = sadd.s32 %s161, %s159
      %s163 = smul.addr %s162, 8
      %s164 = scalar_lea.vmem %s2, %s163
      %s165 = smul.u32 32, %s17
      %p166 = scmp.lt.s32.totalorder %s165, 63
      %s167 = scalar_select %p166, %s165, 63
      %s168 = smul.addr %s167, 8
      %s169 = scalar_lea.vmem %s0, %s168
      %s170 = smul.u32 32, %s17
      %p171 = scmp.lt.s32.totalorder %s18, 0
      %s172 = scalar_select %p171, %s18, 0
      %s173 = smul.addr %s172, 8
      %s174 = scalar_lea.vmem %s1, %s173
      %s175 = smul.u32 4, %s17
      %p176 = scmp.lt.s32.totalorder %s175, 7
      %s177 = scalar_select %p176, %s175, 7
      %p178 = scmp.lt.s32.totalorder %s18, 0
      %s179 = scalar_select %p178, %s18, 0
      %s180 = sadd.s32 %s179, %s177
      %s181 = smul.addr %s180, 8
      %s182 = scalar_lea.vmem %s2, %s181
      %s183 = smul.u32 4, %s17
      %p184 = scmp.eq.s32.totalorder %s18, 0
      // Predicated region
      $region29: #{tpu_custom_call.1} parent=27 // pred_check
        %p185 = pneg %p184
      $region30: #{tpu_custom_call.1} parent=27 // pred_check_branch
        %187 = sbr.rel (%p185) target = $region32
      $region31: #{tpu_custom_call.1} parent=27 // pred_region
        %v188 = vld [vmem:[%s169] sm:$0xff]
        %v189 = vld [vmem:[%s169 + $0x8] sm:$0xff]
        %v190 = vld [vmem:[%s169 + $0x10] sm:$0xff]
        %v191 = vld [vmem:[%s169 + $0x18] sm:$0xff]
        %v192 = vld [vmem:[%s169 + $0x20] sm:$0xff]
        %v193 = vld [vmem:[%s169 + $0x28] sm:$0xff]
        %v194 = vld [vmem:[%s169 + $0x30] sm:$0xff]
        %v195 = vld [vmem:[%s169 + $0x38] sm:$0xff]
        %v196 = vld [vmem:[%s169 + $0x40] sm:$0xff]
        %v197 = vld [vmem:[%s169 + $0x48] sm:$0xff]
        %v198 = vld [vmem:[%s169 + $0x50] sm:$0xff]
        %v199 = vld [vmem:[%s169 + $0x58] sm:$0xff]
        %v200 = vld [vmem:[%s169 + $0x60] sm:$0xff]
        %v201 = vld [vmem:[%s169 + $0x68] sm:$0xff]
        %v202 = vld [vmem:[%s169 + $0x70] sm:$0xff]
        %v203 = vld [vmem:[%s169 + $0x78] sm:$0xff]
        %v204 = vld [vmem:[%s169 + $0x80] sm:$0xff]
        %v205 = vld [vmem:[%s169 + $0x88] sm:$0xff]
        %v206 = vld [vmem:[%s169 + $0x90] sm:$0xff]
        %v207 = vld [vmem:[%s169 + $0x98] sm:$0xff]
        %v208 = vld [vmem:[%s169 + $0xa0] sm:$0xff]
        %v209 = vld [vmem:[%s169 + $0xa8] sm:$0xff]
        %v210 = vld [vmem:[%s169 + $0xb0] sm:$0xff]
        %v211 = vld [vmem:[%s169 + $0xb8] sm:$0xff]
        %v212 = vld [vmem:[%s169 + $0xc0] sm:$0xff]
        %v213 = vld [vmem:[%s169 + $0xc8] sm:$0xff]
        %v214 = vld [vmem:[%s169 + $0xd0] sm:$0xff]
        %v215 = vld [vmem:[%s169 + $0xd8] sm:$0xff]
        %v216 = vld [vmem:[%s169 + $0xe0] sm:$0xff]
        %v217 = vld [vmem:[%s169 + $0xe8] sm:$0xff]
        %v218 = vld [vmem:[%s169 + $0xf0] sm:$0xff]
        %v219 = vld [vmem:[%s169 + $0xf8] sm:$0xff]
        %vm220 = vcmask 261120
        %v221 = vsel %vm220, %v188, 0.0
        %v222 = vrot.slane %v221, 4
        %v223 = vadd.f32 %v221, %v222
        %v224 = vrot.slane %v223, 2
        %v225 = vadd.f32 %v223, %v224
        %v226 = vrot.slane %v225, 1
        %v227 = vadd.f32 %v225, %v226
        %v228 = vsel %vm220, %v189, 0.0
        %v229 = vrot.slane %v228, 4
        %v230 = vadd.f32 %v228, %v229
        %v231 = vrot.slane %v230, 2
        %v232 = vadd.f32 %v230, %v231
        %v233 = vrot.slane %v232, 1
        %v234 = vadd.f32 %v232, %v233
        %v235 = vsel %vm220, %v190, 0.0
        %v236 = vrot.slane %v235, 4
        %v237 = vadd.f32 %v235, %v236
        %v238 = vrot.slane %v237, 2
        %v239 = vadd.f32 %v237, %v238
        %v240 = vrot.slane %v239, 1
        %v241 = vadd.f32 %v239, %v240
        %v242 = vsel %vm220, %v191, 0.0
        %v243 = vrot.slane %v242, 4
        %v244 = vadd.f32 %v242, %v243
        %v245 = vrot.slane %v244, 2
        %v246 = vadd.f32 %v244, %v245
        %v247 = vrot.slane %v246, 1
        %v248 = vadd.f32 %v246, %v247
        %v249 = vsel %vm220, %v192, 0.0
        %v250 = vrot.slane %v249, 4
        %v251 = vadd.f32 %v249, %v250
        %v252 = vrot.slane %v251, 2
        %v253 = vadd.f32 %v251, %v252
        %v254 = vrot.slane %v253, 1
        %v255 = vadd.f32 %v253, %v254
        %v256 = vsel %vm220, %v193, 0.0
        %v257 = vrot.slane %v256, 4
        %v258 = vadd.f32 %v256, %v257
        %v259 = vrot.slane %v258, 2
        %v260 = vadd.f32 %v258, %v259
        %v261 = vrot.slane %v260, 1
        %v262 = vadd.f32 %v260, %v261
        %v263 = vsel %vm220, %v194, 0.0
        %v264 = vrot.slane %v263, 4
        %v265 = vadd.f32 %v263, %v264
        %v266 = vrot.slane %v265, 2
        %v267 = vadd.f32 %v265, %v266
        %v268 = vrot.slane %v267, 1
        %v269 = vadd.f32 %v267, %v268
        %v270 = vsel %vm220, %v195, 0.0
        %v271 = vrot.slane %v270, 4
        %v272 = vadd.f32 %v270, %v271
        %v273 = vrot.slane %v272, 2
        %v274 = vadd.f32 %v272, %v273
        %v275 = vrot.slane %v274, 1
        %v276 = vadd.f32 %v274, %v275
        %v277 = vsel %vm220, %v196, 0.0
        %v278 = vrot.slane %v277, 4
        %v279 = vadd.f32 %v277, %v278
        %v280 = vrot.slane %v279, 2
        %v281 = vadd.f32 %v279, %v280
        %v282 = vrot.slane %v281, 1
        %v283 = vadd.f32 %v281, %v282
        %v284 = vsel %vm220, %v197, 0.0
        %v285 = vrot.slane %v284, 4
        %v286 = vadd.f32 %v284, %v285
        %v287 = vrot.slane %v286, 2
        %v288 = vadd.f32 %v286, %v287
        %v289 = vrot.slane %v288, 1
        %v290 = vadd.f32 %v288, %v289
        %v291 = vsel %vm220, %v198, 0.0
        %v292 = vrot.slane %v291, 4
        %v293 = vadd.f32 %v291, %v292
        %v294 = vrot.slane %v293, 2
        %v295 = vadd.f32 %v293, %v294
        %v296 = vrot.slane %v295, 1
        %v297 = vadd.f32 %v295, %v296
        %v298 = vsel %vm220, %v199, 0.0
        %v299 = vrot.slane %v298, 4
        %v300 = vadd.f32 %v298, %v299
        %v301 = vrot.slane %v300, 2
        %v302 = vadd.f32 %v300, %v301
        %v303 = vrot.slane %v302, 1
        %v304 = vadd.f32 %v302, %v303
        %v305 = vsel %vm220, %v200, 0.0
        %v306 = vrot.slane %v305, 4
        %v307 = vadd.f32 %v305, %v306
        %v308 = vrot.slane %v307, 2
        %v309 = vadd.f32 %v307, %v308
        %v310 = vrot.slane %v309, 1
        %v311 = vadd.f32 %v309, %v310
        %v312 = vsel %vm220, %v201, 0.0
        %v313 = vrot.slane %v312, 4
        %v314 = vadd.f32 %v312, %v313
        %v315 = vrot.slane %v314, 2
        %v316 = vadd.f32 %v314, %v315
        %v317 = vrot.slane %v316, 1
        %v318 = vadd.f32 %v316, %v317
        %v319 = vsel %vm220, %v202, 0.0
        %v320 = vrot.slane %v319, 4
        %v321 = vadd.f32 %v319, %v320
        %v322 = vrot.slane %v321, 2
        %v323 = vadd.f32 %v321, %v322
        %v324 = vrot.slane %v323, 1
        %v325 = vadd.f32 %v323, %v324
        %v326 = vsel %vm220, %v203, 0.0
        %v327 = vrot.slane %v326, 4
        %v328 = vadd.f32 %v326, %v327
        %v329 = vrot.slane %v328, 2
        %v330 = vadd.f32 %v328, %v329
        %v331 = vrot.slane %v330, 1
        %v332 = vadd.f32 %v330, %v331
        %v333 = vsel %vm220, %v204, 0.0
        %v334 = vrot.slane %v333, 4
        %v335 = vadd.f32 %v333, %v334
        %v336 = vrot.slane %v335, 2
        %v337 = vadd.f32 %v335, %v336
        %v338 = vrot.slane %v337, 1
        %v339 = vadd.f32 %v337, %v338
        %v340 = vsel %vm220, %v205, 0.0
        %v341 = vrot.slane %v340, 4
        %v342 = vadd.f32 %v340, %v341
        %v343 = vrot.slane %v342, 2
        %v344 = vadd.f32 %v342, %v343
        %v345 = vrot.slane %v344, 1
        %v346 = vadd.f32 %v344, %v345
        %v347 = vsel %vm220, %v206, 0.0
        %v348 = vrot.slane %v347, 4
        %v349 = vadd.f32 %v347, %v348
        %v350 = vrot.slane %v349, 2
        %v351 = vadd.f32 %v349, %v350
        %v352 = vrot.slane %v351, 1
        %v353 = vadd.f32 %v351, %v352
        %v354 = vsel %vm220, %v207, 0.0
        %v355 = vrot.slane %v354, 4
        %v356 = vadd.f32 %v354, %v355
        %v357 = vrot.slane %v356, 2
        %v358 = vadd.f32 %v356, %v357
        %v359 = vrot.slane %v358, 1
        %v360 = vadd.f32 %v358, %v359
        %v361 = vsel %vm220, %v208, 0.0
        %v362 = vrot.slane %v361, 4
        %v363 = vadd.f32 %v361, %v362
        %v364 = vrot.slane %v363, 2
        %v365 = vadd.f32 %v363, %v364
        %v366 = vrot.slane %v365, 1
        %v367 = vadd.f32 %v365, %v366
        %v368 = vsel %vm220, %v209, 0.0
        %v369 = vrot.slane %v368, 4
        %v370 = vadd.f32 %v368, %v369
        %v371 = vrot.slane %v370, 2
        %v372 = vadd.f32 %v370, %v371
        %v373 = vrot.slane %v372, 1
        %v374 = vadd.f32 %v372, %v373
        %v375 = vsel %vm220, %v210, 0.0
        %v376 = vrot.slane %v375, 4
        %v377 = vadd.f32 %v375, %v376
        %v378 = vrot.slane %v377, 2
        %v379 = vadd.f32 %v377, %v378
        %v380 = vrot.slane %v379, 1
        %v381 = vadd.f32 %v379, %v380
        %v382 = vsel %vm220, %v211, 0.0
        %v383 = vrot.slane %v382, 4
        %v384 = vadd.f32 %v382, %v383
        %v385 = vrot.slane %v384, 2
        %v386 = vadd.f32 %v384, %v385
        %v387 = vrot.slane %v386, 1
        %v388 = vadd.f32 %v386, %v387
        %v389 = vsel %vm220, %v212, 0.0
        %v390 = vrot.slane %v389, 4
        %v391 = vadd.f32 %v389, %v390
        %v392 = vrot.slane %v391, 2
        %v393 = vadd.f32 %v391, %v392
        %v394 = vrot.slane %v393, 1
        %v395 = vadd.f32 %v393, %v394
        %v396 = vsel %vm220, %v213, 0.0
        %v397 = vrot.slane %v396, 4
        %v398 = vadd.f32 %v396, %v397
        %v399 = vrot.slane %v398, 2
        %v400 = vadd.f32 %v398, %v399
        %v401 = vrot.slane %v400, 1
        %v402 = vadd.f32 %v400, %v401
        %v403 = vsel %vm220, %v214, 0.0
        %v404 = vrot.slane %v403, 4
        %v405 = vadd.f32 %v403, %v404
        %v406 = vrot.slane %v405, 2
        %v407 = vadd.f32 %v405, %v406
        %v408 = vrot.slane %v407, 1
        %v409 = vadd.f32 %v407, %v408
        %v410 = vsel %vm220, %v215, 0.0
        %v411 = vrot.slane %v410, 4
        %v412 = vadd.f32 %v410, %v411
        %v413 = vrot.slane %v412, 2
        %v414 = vadd.f32 %v412, %v413
        %v415 = vrot.slane %v414, 1
        %v416 = vadd.f32 %v414, %v415
        %v417 = vsel %vm220, %v216, 0.0
        %v418 = vrot.slane %v417, 4
        %v419 = vadd.f32 %v417, %v418
        %v420 = vrot.slane %v419, 2
        %v421 = vadd.f32 %v419, %v420
        %v422 = vrot.slane %v421, 1
        %v423 = vadd.f32 %v421, %v422
        %v424 = vsel %vm220, %v217, 0.0
        %v425 = vrot.slane %v424, 4
        %v426 = vadd.f32 %v424, %v425
        %v427 = vrot.slane %v426, 2
        %v428 = vadd.f32 %v426, %v427
        %v429 = vrot.slane %v428, 1
        %v430 = vadd.f32 %v428, %v429
        %v431 = vsel %vm220, %v218, 0.0
        %v432 = vrot.slane %v431, 4
        %v433 = vadd.f32 %v431, %v432
        %v434 = vrot.slane %v433, 2
        %v435 = vadd.f32 %v433, %v434
        %v436 = vrot.slane %v435, 1
        %v437 = vadd.f32 %v435, %v436
        %v438 = vsel %vm220, %v219, 0.0
        %v439 = vrot.slane %v438, 4
        %v440 = vadd.f32 %v438, %v439
        %v441 = vrot.slane %v440, 2
        %v442 = vadd.f32 %v440, %v441
        %v443 = vrot.slane %v442, 1
        %v444 = vadd.f32 %v442, %v443
        %v445 = vmul.f32 %v227, 0.125
        %v446 = vmul.f32 %v234, 0.125
        %v447 = vmul.f32 %v241, 0.125
        %v448 = vmul.f32 %v248, 0.125
        %v449 = vmul.f32 %v255, 0.125
        %v450 = vmul.f32 %v262, 0.125
        %v451 = vmul.f32 %v269, 0.125
        %v452 = vmul.f32 %v276, 0.125
        %v453 = vmul.f32 %v283, 0.125
        %v454 = vmul.f32 %v290, 0.125
        %v455 = vmul.f32 %v297, 0.125
        %v456 = vmul.f32 %v304, 0.125
        %v457 = vmul.f32 %v311, 0.125
        %v458 = vmul.f32 %v318, 0.125
        %v459 = vmul.f32 %v325, 0.125
        %v460 = vmul.f32 %v332, 0.125
        %v461 = vmul.f32 %v339, 0.125
        %v462 = vmul.f32 %v346, 0.125
        %v463 = vmul.f32 %v353, 0.125
        %v464 = vmul.f32 %v360, 0.125
        %v465 = vmul.f32 %v367, 0.125
        %v466 = vmul.f32 %v374, 0.125
        %v467 = vmul.f32 %v381, 0.125
        %v468 = vmul.f32 %v388, 0.125
        %v469 = vmul.f32 %v395, 0.125
        %v470 = vmul.f32 %v402, 0.125
        %v471 = vmul.f32 %v409, 0.125
        %v472 = vmul.f32 %v416, 0.125
        %v473 = vmul.f32 %v423, 0.125
        %v474 = vmul.f32 %v430, 0.125
        %v475 = vmul.f32 %v437, 0.125
        %v476 = vmul.f32 %v444, 0.125
        %vm509 = vcmask 1041409
        %v510 = vsel %vm509, %v446, %v445
        %vm511 = vcmask 1042434
        %v512 = vsel %vm511, %v447, %v510
        %vm513 = vcmask 1043459
        %v514 = vsel %vm513, %v448, %v512
        %vm515 = vcmask 1044484
        %v516 = vsel %vm515, %v449, %v514
        %vm517 = vcmask 1045509
        %v518 = vsel %vm517, %v450, %v516
        %vm519 = vcmask 1046534
        %v520 = vsel %vm519, %v451, %v518
        %vm521 = vcmask 1047559
        %v522 = vsel %vm521, %v452, %v520
        %v523 = vsel %vm509, %v454, %v453
        %v524 = vsel %vm511, %v455, %v523
        %v525 = vsel %vm513, %v456, %v524
        %v526 = vsel %vm515, %v457, %v525
        %v527 = vsel %vm517, %v458, %v526
        %v528 = vsel %vm519, %v459, %v527
        %v529 = vsel %vm521, %v460, %v528
        %v530 = vsel %vm509, %v462, %v461
        %v531 = vsel %vm511, %v463, %v530
        %v532 = vsel %vm513, %v464, %v531
        %v533 = vsel %vm515, %v465, %v532
        %v534 = vsel %vm517, %v466, %v533
        %v535 = vsel %vm519, %v467, %v534
        %v536 = vsel %vm521, %v468, %v535
        %v537 = vsel %vm509, %v470, %v469
        %v538 = vsel %vm511, %v471, %v537
        %v539 = vsel %vm513, %v472, %v538
        %v540 = vsel %vm515, %v473, %v539
        %v541 = vsel %vm517, %v474, %v540
        %v542 = vsel %vm519, %v475, %v541
        %v543 = vsel %vm521, %v476, %v542
        %548 = vst.msk [vmem:[#allocation2] sm:$0xff] %vm220, %v522
        %549 = vst.msk [vmem:[#allocation2 + $0x8] sm:$0xff] %vm220, %v529
        %550 = vst.msk [vmem:[#allocation2 + $0x10] sm:$0xff] %vm220, %v536
        %551 = vst.msk [vmem:[#allocation2 + $0x18] sm:$0xff] %vm220, %v543
      $region32: #{tpu_custom_call.1} parent=27 // pred_fallthru
        _
      %v552 = vld [vmem:[#allocation2] sm:$0xff]
      %v553 = vld [vmem:[#allocation2 + $0x8] sm:$0xff]
      %v554 = vld [vmem:[#allocation2 + $0x10] sm:$0xff]
      %v555 = vld [vmem:[#allocation2 + $0x18] sm:$0xff]
      %v556 = vld [vmem:[%s174] sm:$0xff]
      %v557 = vld [vmem:[%s174 + $0x8] sm:$0xff]
      %v558 = vld [vmem:[%s174 + $0x10] sm:$0xff]
      %v559 = vld [vmem:[%s174 + $0x18] sm:$0xff]
      %vm560 = vcmask 261120
      %v562 = vsel %vm560, %v552, 0
      %v565 = vsel %vm560, %v553, 0
      %v568 = vsel %vm560, %v554, 0
      %v571 = vsel %vm560, %v555, 0
      %573 = vmatprep.subr.mxu0 0.0
      %574 = vmatpush1.msra.mxu0 %v556
      %575 = vmatprep.subr.mxu0 0.0
      %576 = vmatpush1.msra.mxu0 %v557
      %577 = vmatprep.subr.mxu0 0.0
      %578 = vmatpush1.msra.mxu0 %v558
      %579 = vmatprep.subr.mxu0 0.0
      %580 = vmatpush1.msra.mxu0 %v559
      %581 = vmatprep.subr.mxu0 0.0
      %582 = vmatpush1.msra.mxu0 0.0
      %583 = vmatprep.subr.mxu0 0.0
      %584 = vmatpush1.msra.mxu0 0.0
      %585 = vmatprep.subr.mxu0 0.0
      %586 = vmatpush1.msra.mxu0 0.0
      %587 = vmatprep.subr.mxu0 0.0
      %588 = vmatpush1.msra.mxu0 0.0
      %589 = vmatprep.subr.mxu0 0.0
      %590 = vmatpush1.msra.mxu0 0.0
      %591 = vmatprep.subr.mxu0 0.0
      %592 = vmatpush1.msra.mxu0 0.0
      %593 = vmatprep.subr.mxu0 0.0
      %594 = vmatpush1.msra.mxu0 0.0
      %595 = vmatprep.subr.mxu0 0.0
      %596 = vmatpush1.msra.mxu0 0.0
      %597 = vmatprep.subr.mxu0 0.0
      %598 = vmatpush1.msra.mxu0 0.0
      %599 = vmatprep.subr.mxu0 0.0
      %600 = vmatpush1.msra.mxu0 0.0
      %601 = vmatprep.subr.mxu0 0.0
      %602 = vmatpush1.msra.mxu0 0.0
      %603 = vmatprep.subr.mxu0 0.0
      %604 = vmatpush1.msra.mxu0 0.0
      %605 = vmatprep.subr.mxu0 0.0
      %606 = vmatpush1.msra.mxu0 0.0
      %607 = vmatprep.subr.mxu0 0.0
      %608 = vmatpush1.msra.mxu0 0.0
      %609 = vmatprep.subr.mxu0 0.0
      %610 = vmatpush1.msra.mxu0 0.0
      %611 = vmatprep.subr.mxu0 0.0
      %612 = vmatpush1.msra.mxu0 0.0
      %613 = vmatprep.subr.mxu0 0.0
      %614 = vmatpush1.msra.mxu0 0.0
      %615 = vmatprep.subr.mxu0 0.0
      %616 = vmatpush1.msra.mxu0 0.0
      %617 = vmatprep.subr.mxu0 0.0
      %618 = vmatpush1.msra.mxu0 0.0
      %619 = vmatprep.subr.mxu0 0.0
      %620 = vmatpush1.msra.mxu0 0.0
      %621 = vmatprep.subr.mxu0 0.0
      %622 = vmatpush1.msra.mxu0 0.0
      %623 = vmatprep.subr.mxu0 0.0
      %624 = vmatpush1.msra.mxu0 0.0
      %625 = vmatprep.subr.mxu0 0.0
      %626 = vmatpush1.msra.mxu0 0.0
      %627 = vmatprep.subr.mxu0 0.0
      %628 = vmatpush1.msra.mxu0 0.0
      %629 = vmatprep.subr.mxu0 0.0
      %630 = vmatpush1.msra.mxu0 0.0
      %631 = vmatprep.subr.mxu0 0.0
      %632 = vmatpush1.msra.mxu0 0.0
      %633 = vmatprep.subr.mxu0 0.0
      %634 = vmatpush1.msra.mxu0 0.0
      %635 = vmatprep.subr.mxu0 0.0
      %636 = vmatpush1.msra.mxu0 0.0
      %637 = vmatprep.mubr.f32.mxu0 0.0
      %638 = vmatmul.mubr.f32.gmra.mrb[0].mxu0 %v562
      %v639 = vpop.f32.mrb[0].mxu0
      %v640 = vadd.f32 0.0, %v639
      %v641 = vpop.f32.mrb[0].mxu0
      %642 = vmatprep.mubr.f32.mxu0 0.0
      %643 = vmatmul.mubr.f32.gmra.mrb[0].mxu0 %v565
      %v644 = vpop.f32.mrb[0].mxu0
      %v645 = vadd.f32 0.0, %v644
      %v646 = vpop.f32.mrb[0].mxu0
      %647 = vmatprep.mubr.f32.mxu0 0.0
      %648 = vmatmul.mubr.f32.gmra.mrb[0].mxu0 %v568
      %v649 = vpop.f32.mrb[0].mxu0
      %v650 = vadd.f32 0.0, %v649
      %v651 = vpop.f32.mrb[0].mxu0
      %652 = vmatprep.mubr.f32.mxu0 0.0
      %653 = vmatmul.mubr.f32.gmra.mrb[0].mxu0 %v571
      %v654 = vpop.f32.mrb[0].mxu0
      %v655 = vadd.f32 0.0, %v654
      %v656 = vpop.f32.mrb[0].mxu0
      %657 = vdwg.mxu0
      %658 = vst.msk [vmem:[%s182] sm:$0xff] %vm560, %v640
      %659 = vst.msk [vmem:[%s182 + $0x8] sm:$0xff] %vm560, %v645
      %660 = vst.msk [vmem:[%s182 + $0x10] sm:$0xff] %vm560, %v650
      %661 = vst.msk [vmem:[%s182 + $0x18] sm:$0xff] %vm560, %v655
      %s662 = smul.u32 4, %s17
      %p663 = scmp.lt.s32.totalorder %s662, 7
      %s664 = scalar_select %p663, %s662, 7
      %p665 = scmp.lt.s32.totalorder %s18, 0
      %s666 = scalar_select %p665, %s18, 0
      %s667 = sadd.s32 %s666, %s664
      %s668 = smul.addr %s667, 8
      %s669 = scalar_lea.vmem %s2, %s668
      // Predicated region
      $region33: #{tpu_custom_call.1} parent=27 // pred_check
        %p670 = pneg %p97
      $region34: #{tpu_custom_call.1} parent=27 // pred_check_branch
        %672 = sbr.rel (%p670) target = $region36
      $region35: #{tpu_custom_call.1} parent=27 // pred_region
        %s673 = smul.u32 4, %s17
      $region36: #{tpu_custom_call.1} parent=27 // pred_fallthru
        _
    $region28: #{tpu_custom_call.1} parent=5 // pred_fallthru
      _
    %p674 = scmp.le.s32.totalorder 2, %s8
    // Predicated region
    $region37: #{tpu_custom_call.1} parent=5 // pred_check
      %p675 = pneg %p674
    $region38: #{tpu_custom_call.1} parent=5 // pred_check_branch
      %677 = sbr.rel (%p675) target = $region40
    $region39: #{tpu_custom_call.1} parent=5 // pred_region
      %s678 = ssub.s32 %s8, 2
      // Predicated region
      $region41: #{tpu_custom_call.1} parent=39 // pred_check
        %p679 = pneg %p103
      $region42: #{tpu_custom_call.1} parent=39 // pred_check_branch
        %681 = sbr.rel (%p679) target = $region44
      $region43: #{tpu_custom_call.1} parent=39 // pred_region
        %s682 = smul.u32 4, %s19
        %p683 = scmp.lt.s32.totalorder %s682, 7
        %s684 = scalar_select %p683, %s682, 7
        %p685 = scmp.lt.s32.totalorder %s20, 0
        %s686 = scalar_select %p685, %s20, 0
        %s687 = sadd.s32 %s686, %s684
        %s688 = smul.addr %s687, 8
        %s689 = scalar_lea.vmem %s2, %s688
      $region44: #{tpu_custom_call.1} parent=39 // pred_fallthru
        _
    $region40: #{tpu_custom_call.1} parent=5 // pred_fallthru
      _
  $region6: #{tpu_custom_call.1} parent=0 // loop_footer
    %s12 = sadd.s32 1, %s8
  $region7: #{tpu_custom_call.1} parent=0 // loop_footer_branch
    %7 = sbr.rel target = $region3
  $region8: #{tpu_custom_call.1} parent=0 // loop_exit
    _

</llo_original>
